<compile_context>
chip_gen: v7x
topology: tpu7x:2x2x1
jax: 0.10.0
libtpu: 0.0.40
codegen_flags: <defaults>
</compile_context>

<pallas_src>
import jax
import jax.numpy as jnp
import numpy as np
from jax.experimental import pallas as pl
from jax.experimental.pallas import tpu as pltpu


# ---------------------------------------------------------------------------
# Kernel 1: theta = x @ W0, rows normalized to unit L2 norm.
# ---------------------------------------------------------------------------
def _project_normalize_kernel(x_ref, w_ref, o_ref):
    # x_ref: (TM, F), w_ref: (F, D), o_ref: (TM, D)
    theta = jnp.dot(x_ref[...], w_ref[...], preferred_element_type=jnp.float32)
    # NOTE: epsilon handling differs slightly from the reference
    # (rsqrt(||t||^2 + 1e-20) per row vs dividing by (||a||*||b|| + 1e-20));
    # identical for non-degenerate rows, both degenerate for near-zero rows.
    inv_norm = jax.lax.rsqrt(
        jnp.sum(theta * theta, axis=-1, keepdims=True) + 1e-20)   # EUP rsqrt
    o_ref[...] = (theta * inv_norm).astype(o_ref.dtype)


# ---------------------------------------------------------------------------
# Kernel 2: cosine similarity (rows are already unit-norm), threshold, softmax.
# ---------------------------------------------------------------------------
def _sim_softmax_kernel(thk_ref, thq_ref, o_ref):
    # thk_ref: (BB, T, D)   keys block, resident across the q grid axis
    # thq_ref: (BB, TQ, D)  query rows of this tile
    # o_ref:   (BB, TQ, T)  adjacency rows [q*TQ, q*TQ+TQ)
    sim = jnp.einsum("bqd,bkd->bqk", thq_ref[...], thk_ref[...],
                     preferred_element_type=jnp.float32)          # (BB, TQ, T)

    # F.threshold(sim, 0.7, 0): keep values strictly greater than 0.7.
    sim = jnp.where(sim > 0.7, sim, 0.0)

    # Row softmax.  Max-subtraction is skipped: sim is in {0} U (0.7, ~1]
    # (unit-norm cosine after threshold) so exp cannot overflow.  This is only
    # safe because of the normalization + threshold above.
    e = jnp.exp(sim)
    s = jnp.sum(e, axis=-1, keepdims=True)
    # Exact reciprocal (approx=False default): output-bandwidth-bound kernel,
    # so the extra precision is free and rows stay row-stochastic to f32 ulp.
    o_ref[...] = (e * pl.reciprocal(s)).astype(o_ref.dtype)


# ---------------------------------------------------------------------------
# Tiling / VMEM budgeting (generation-aware).
# ---------------------------------------------------------------------------
def _vmem_capacity_bytes():
    try:
        cap = int(getattr(pltpu.get_tpu_info(), "vmem_capacity_bytes", 0))
        if cap > 0:
            return cap
    except Exception:
        pass
    return 64 * 1024 * 1024  # conservative fallback: v7x per-TensorCore VMEM


def _vmem_limit_bytes(working_set, cap):
    # At least 2x the estimated working set (which already counts the
    # double-buffered blocks), never below 32 MiB, never above ~95% physical.
    return int(min(max(2 * working_set, 32 * 1024 * 1024), int(cap * 0.95)))


def _divisor_candidates(n, cands):
    # Full extent first (always a legal block: equals the array dim), then
    # smaller multiples-of-8 divisors, largest first.
    return [n] + [c for c in cands if c < n and n % c == 0]


def _choose_proj_tile(n_rows, F, D, x_bytes, th_bytes, budget):
    def vmem(tm):
        return (2 * tm * F * x_bytes       # double-buffered x block
                + F * D * x_bytes          # resident weight
                + 2 * tm * D * th_bytes    # double-buffered theta block
                + 3 * tm * D * 4)          # f32 temporaries + slack
    cands = _divisor_candidates(n_rows, (2048, 1024, 512, 256, 128, 64, 32, 16, 8))
    for tm in cands:
        if vmem(tm) <= budget:
            return tm, vmem(tm)
    tm = 8 if n_rows % 8 == 0 else n_rows
    return tm, vmem(tm)


def _choose_sim_tiles(B, T, D, th_bytes, out_bytes, budget):
    def vmem(bb, tq):
        return (2 * bb * T * D * th_bytes      # keys block (double-buffered)
                + 2 * bb * tq * D * th_bytes   # query block
                + 2 * bb * tq * T * out_bytes  # output block
                + 3 * bb * tq * T * 4)         # f32 sim/exp temporaries + slack
    tq_cands = _divisor_candidates(T, (1024, 512, 256, 128, 64, 32, 16, 8))
    bb_cands = [bb for bb in range(min(B, 8), 0, -1) if B % bb == 0]

    bb, tq = 1, tq_cands[-1]
    for tq_c in tq_cands:           # prefer the largest (lane-dense) output tile
        done = False
        for bb_c in bb_cands:       # then fold batches to amortize per-step cost
            if vmem(bb_c, tq_c) <= budget:
                bb, tq, done = bb_c, tq_c, True
                break
        if done:
            break

    # Megacore (v7x has 2 TensorCores): if the whole problem collapsed to a
    # single grid step, split it so the second core has work.
    if B // bb == 1 and T // tq == 1:
        smaller_bb = [d for d in bb_cands if d < bb]
        smaller_tq = [c for c in tq_cands if c < tq]
        if smaller_bb:
            bb = smaller_bb[0]
        elif smaller_tq:
            tq = smaller_tq[0]

    return bb, tq, vmem(bb, tq)


# ---------------------------------------------------------------------------
# Wrapper.
# ---------------------------------------------------------------------------
def similarity_adj(x, weight0, *, mxu_dtype=jnp.float32, out_dtype=jnp.float32):
    """x: (B, T, F), weight0: (F, D) -> (B, T, T) adjacency (SimilarityAdj fwd).

    mxu_dtype=jnp.bfloat16 feeds the MXU bf16 operands and stores the theta
    intermediate in bf16 (recommended on v6e/v7x); accumulation, thresholding
    and softmax always stay in f32.  Note: similarities within ~1e-2 of the 0.7
    threshold may flip sides vs the f32 path (changes which edges survive).
    out_dtype=jnp.bfloat16 halves output HBM writeback if the consumer allows.
    """
    B, T, F = x.shape
    Fw, D = weight0.shape
    assert F == Fw

    use_bf16 = (mxu_dtype == jnp.bfloat16)
    th_dtype = jnp.bfloat16 if use_bf16 else jnp.float32
    x_bytes = 2 if use_bf16 else 4
    th_bytes = 2 if use_bf16 else 4
    out_bytes = jnp.dtype(out_dtype).itemsize

    cap = _vmem_capacity_bytes()
    budget = int(cap * 0.45)   # ~57 MiB on v5e/v6e (128 MiB), ~28 MiB on v7x (64 MiB)

    if use_bf16:
        # Cast before the pallas_call so the HBM->VMEM DMA moves bf16, not f32.
        x_in = x.astype(jnp.bfloat16)
        w_in = weight0.astype(jnp.bfloat16)
    else:
        x_in = x.astype(jnp.float32)
        w_in = weight0.astype(jnp.float32)

    # ---- kernel 1: fused projection + row normalization over all B*T rows ----
    n_rows = B * T
    tm, proj_ws = _choose_proj_tile(n_rows, F, D, x_bytes, th_bytes, budget)
    theta = pl.pallas_call(
        _project_normalize_kernel,
        out_shape=jax.ShapeDtypeStruct((n_rows, D), th_dtype),
        grid_spec=pltpu.PrefetchScalarGridSpec(
            num_scalar_prefetch=0,
            grid=(n_rows // tm,),
            in_specs=[
                pl.BlockSpec((tm, F), lambda i: (i, 0)),
                pl.BlockSpec((F, D), lambda i: (0, 0)),   # resident weight
            ],
            out_specs=pl.BlockSpec((tm, D), lambda i: (i, 0)),
        ),
        compiler_params=pltpu.CompilerParams(
            dimension_semantics=("parallel",),
            vmem_limit_bytes=_vmem_limit_bytes(proj_ws, cap)),
    )(x_in.reshape(n_rows, F), w_in)
    theta = theta.reshape(B, T, D)

    # ---- kernel 2: similarity + threshold + row softmax ----------------------
    bb, tq, sim_ws = _choose_sim_tiles(B, T, D, th_bytes, out_bytes, budget)
    out = pl.pallas_call(
        _sim_softmax_kernel,
        out_shape=jax.ShapeDtypeStruct((B, T, T), out_dtype),
        grid_spec=pltpu.PrefetchScalarGridSpec(
            num_scalar_prefetch=0,
            grid=(B // bb, T // tq),
            in_specs=[
                pl.BlockSpec((bb, T, D), lambda b, q: (b, 0, 0)),   # keys, resident over q
                pl.BlockSpec((bb, tq, D), lambda b, q: (b, q, 0)),  # query rows per tile
            ],
            out_specs=pl.BlockSpec((bb, tq, T), lambda b, q: (b, q, 0)),
        ),
        compiler_params=pltpu.CompilerParams(
            # every (b, q) tile is written exactly once and is independent, so
            # both axes are megacore-shardable.
            dimension_semantics=("parallel", "parallel"),
            vmem_limit_bytes=_vmem_limit_bytes(sim_ws, cap)),
    )(theta, theta)
    return out


# ---------------------------------------------------------------------------
# Pure-JAX reference mirroring the PyTorch module (seq_len=None branch).
# ---------------------------------------------------------------------------
def _reference(x, w0):
    theta = jnp.einsum("btf,fd->btd", x, w0)
    sim = jnp.einsum("btd,bsd->bts", theta, theta)
    norm = jnp.linalg.norm(theta, axis=-1, keepdims=True)
    denom = jnp.einsum("bto,bso->bts", norm, norm)
    sim = sim / (denom + 1e-20)
    sim = jnp.where(sim > 0.7, sim, 0.0)
    return jax.nn.softmax(sim, axis=-1)


if __name__ == "__main__":
    in_features = 32
    out_features = 32
    B, T = 2, 8

    key = jax.random.PRNGKey(0)
    k_x, k_w0, k_w1 = jax.random.split(key, 3)

    # deterministic xavier_uniform-style init for weight0 / weight1
    bound = float(np.sqrt(6.0 / (in_features + out_features)))
    weight0 = jax.random.uniform(
        k_w0, (in_features, out_features), jnp.float32, -bound, bound)
    weight1 = jax.random.uniform(  # unused by the forward pass (matches PyTorch)
        k_w1, (in_features, out_features), jnp.float32, -bound, bound)

    x = jax.random.normal(k_x, (B, T, in_features), jnp.float32)

    ref = np.asarray(_reference(x, weight0))

    # fp32 MXU path: tight check (tolerance covers the normalize-before-matmul
    # reordering and threshold-boundary effects, both << 1e-3 for random data).
    out = jax.block_until_ready(similarity_adj(x, weight0))
    np.testing.assert_allclose(np.asarray(out), ref, rtol=2e-3, atol=2e-3)

    # bf16-fed MXU path (v6e/v7x recommendation): structural checks only, since
    # similarities within ~1e-2 of the 0.7 threshold may flip sides vs fp32.
    out_bf16 = np.asarray(jax.block_until_ready(
        similarity_adj(x, weight0, mxu_dtype=jnp.bfloat16)))
    assert np.all(np.isfinite(out_bf16))
    row_sums = out_bf16.sum(-1)
    np.testing.assert_allclose(row_sums, np.ones_like(row_sums), rtol=0, atol=5e-3)
    assert float(np.mean(np.abs(out_bf16 - ref))) < 1e-2

    print("KERNEL_OK")
</pallas_src>

<mosaic_0001>
module attributes {stable_mosaic.version = 11 : i64} {
  func.func @_project_normalize_kernel(%arg0: i32, %arg1: memref<16x32xf32, #tpu.memory_space<vmem>>, %arg2: memref<32x32xf32, #tpu.memory_space<vmem>>, %arg3: memref<16x32xf32, #tpu.memory_space<vmem>>) attributes {dimension_semantics = [#tpu.dimension_semantics<parallel>], iteration_bounds = array<i64: 1>, scalar_prefetch = 0 : i64, scratch_operands = 0 : i64, tpu.core_type = #tpu.core_type<tc>, window_params = [{transform_indices = @transform_0, window_bounds = array<i64: 16, 32>}, {pipeline_mode = #tpu.pipeline_mode<synchronous>, transform_indices = @transform_1, window_bounds = array<i64: 32, 32>}, {transform_indices = @transform_2, window_bounds = array<i64: 16, 32>}]} {
    %c0 = arith.constant 0 : index
    %c0_0 = arith.constant 0 : index
    %0 = vector.load %arg1[%c0, %c0_0] : memref<16x32xf32, #tpu.memory_space<vmem>>, vector<16x32xf32>
    %c0_1 = arith.constant 0 : index
    %c0_2 = arith.constant 0 : index
    %1 = vector.load %arg2[%c0_1, %c0_2] : memref<32x32xf32, #tpu.memory_space<vmem>>, vector<32x32xf32>
    %cst = arith.constant dense<0.000000e+00> : vector<16x32xf32>
    %2 = tpu.matmul %0, %1, %cst {dimension_numbers = #tpu.dot_dimension_numbers<[1], [0], [0], [1], [0, 0, 1, 1], [], []>} : vector<16x32xf32>, vector<32x32xf32>, vector<16x32xf32> -> vector<16x32xf32>
    %3 = arith.mulf %2, %2 : vector<16x32xf32>
    %cst_3 = arith.constant dense<0.000000e+00> : vector<16xf32>
    %4 = vector.multi_reduction <add>, %3, %cst_3 [1] : vector<16x32xf32> to vector<16xf32>
    %5 = vector.shape_cast %4 : vector<16xf32> to vector<16x1xf32>
    %cst_4 = arith.constant 9.99999968E-21 : f32
    %6 = vector.broadcast %cst_4 : f32 to vector<16x1xf32>
    %7 = arith.addf %5, %6 : vector<16x1xf32>
    %8 = math.rsqrt %7 : vector<16x1xf32>
    %9 = vector.broadcast %8 : vector<16x1xf32> to vector<16x32xf32>
    %10 = arith.mulf %2, %9 : vector<16x32xf32>
    %c0_5 = arith.constant 0 : index
    %c0_6 = arith.constant 0 : index
    %11 = vector.load %arg3[%c0_5, %c0_6] : memref<16x32xf32, #tpu.memory_space<vmem>>, vector<16x32xf32>
    tpu.vector_store %arg3[%c0_5, %c0_6], %10 {strides = array<i32>} : memref<16x32xf32, #tpu.memory_space<vmem>>, vector<16x32xf32>,
    return
  }
  func.func @transform_0(%arg0: i32) -> (i32, i32) {
    %c0_i32 = arith.constant 0 : i32
    %c0_i32_0 = arith.constant 0 : i32
    return %arg0, %c0_i32 : i32, i32
  }
  func.func @transform_1(%arg0: i32) -> (i32, i32) {
    %c0_i32 = arith.constant 0 : i32
    %c0_i32_0 = arith.constant 0 : i32
    %c0_i32_1 = arith.constant 0 : i32
    return %c0_i32, %c0_i32_0 : i32, i32
  }
  func.func @transform_2(%arg0: i32) -> (i32, i32) {
    %c0_i32 = arith.constant 0 : i32
    %c0_i32_0 = arith.constant 0 : i32
    return %arg0, %c0_i32 : i32, i32
  }
}

</mosaic_0001>

<llo_original>
// kernel: tpu_custom_call.1
$region0: #{tpu_custom_call.1}
  #allocation0 [shape = 'u32[]', space=smem, size = 0x4, offset = 0x4, fixed_abs, tag = 'smem constant byte address 0x4 - core index']
  #allocation1 [shape = 'u32[144,128]{1,0:T(1,128)}', space=vmem, size = 0x12000, scoped, tag = 'internal scratch']
  %s0 = inlined_call_operand.hbm [shape: f32[16,32], index: 0, kind: input, shape index: {}]
  %s1 = inlined_call_operand.hbm [shape: f32[32,32], index: 1, kind: input, shape index: {}]
  %s2 = inlined_call_operand.hbm [shape: f32[16,32], index: 2, kind: output, shape index: {}]
  %s3 = sld [smem:[#allocation0]]
  $region26: #{tpu_custom_call.1} parent=0
    _
  %s5 = ssub.s32 1, %s3
  %s6 = scalar_select 0, %s5, %s3
  $region1: #{tpu_custom_call.1} parent=0
    #allocation2 [shape = 'u8[8192]{0}', space=vmem, size = 0x2000, scoped, tag = 'input window, operand 0, single buffered']
    #allocation3 [shape = 's32[1]{0}', space=sflag, size = 0x4, scoped, tag = 'scoped memory for tpu_custom_call.1']
    #allocation4 [shape = 's32[1]{0}', space=sflag, size = 0x4, scoped, tag = 'scoped memory for tpu_custom_call.1']
    #allocation5 [shape = 'u8[16384]{0}', space=vmem, size = 0x4000, scoped, tag = 'input window, operand 1, single buffered']
    #allocation6 [shape = 's32[1]{0}', space=sflag, size = 0x4, scoped, tag = 'scoped memory for tpu_custom_call.1']
    #allocation7 [shape = 'u8[8192]{0}', space=vmem, size = 0x2000, scoped, tag = 'output window, operand 0, single buffered']
    %7 = vsyncpa [#allocation3], 0
    %8 = vsyncpa [#allocation6], 0
    %9 = vsyncpa [#allocation4], 0
    // Predicated region
    $region2: #{tpu_custom_call.1} parent=1 // pred_check
      _
    $region3: #{tpu_custom_call.1} parent=1 // pred_check_branch
      %11 = sbr.rel (0) target = $region5
    $region4: #{tpu_custom_call.1} parent=1 // pred_region
      %s13 = ssub.s32 256, 256
      %14 = vsyncadd [#allocation3], %s13
      %s15 = sshll.u32 [#allocation2], 4
      %s16 = int_to_ptr.vmem [resolvable:$true] %s15
      %21 = dma.hbm_to_vmem [thread:$0]  %s0, 256, %s16, [#allocation3], 128, 128, 8
    $region5: #{tpu_custom_call.1} parent=1 // pred_fallthru
      _
    // Predicated region
    $region6: #{tpu_custom_call.1} parent=1 // pred_check
      _
    $region7: #{tpu_custom_call.1} parent=1 // pred_check_branch
      %23 = sbr.rel (0) target = $region9
    $region8: #{tpu_custom_call.1} parent=1 // pred_region
      %s25 = ssub.s32 512, 512
      %26 = vsyncadd [#allocation6], %s25
      %s27 = sshll.u32 [#allocation5], 4
      %s28 = int_to_ptr.vmem [resolvable:$true] %s27
      %33 = dma.hbm_to_vmem [thread:$0]  %s1, 512, %s28, [#allocation6], 128, 128, 8
    $region9: #{tpu_custom_call.1} parent=1 // pred_fallthru
      _
    // Predicated region
    $region10: #{tpu_custom_call.1} parent=1 // pred_check
      _
    $region11: #{tpu_custom_call.1} parent=1 // pred_check_branch
      %35 = sbr.rel (0) target = $region13
    $region12: #{tpu_custom_call.1} parent=1 // pred_region
      %36 = dma.done [#allocation3], 256
    $region13: #{tpu_custom_call.1} parent=1 // pred_fallthru
      _
    // Predicated region
    $region14: #{tpu_custom_call.1} parent=1 // pred_check
      _
    $region15: #{tpu_custom_call.1} parent=1 // pred_check_branch
      %38 = sbr.rel (0) target = $region17
    $region16: #{tpu_custom_call.1} parent=1 // pred_region
      %39 = dma.done [#allocation6], 512
    $region17: #{tpu_custom_call.1} parent=1 // pred_fallthru
      _
    %v40 = vld [vmem:[#allocation2] sm:$0xff]
    %v41 = vld [vmem:[#allocation2 + $0x8] sm:$0xff]
    %v42 = vld [vmem:[#allocation5] sm:$0xff]
    %v43 = vld [vmem:[#allocation5 + $0x8] sm:$0xff]
    %v44 = vld [vmem:[#allocation5 + $0x10] sm:$0xff]
    %v45 = vld [vmem:[#allocation5 + $0x18] sm:$0xff]
    %vm46 = vcmask 261120
    %v48 = vsel %vm46, %v40, 0
    %v51 = vsel %vm46, %v41, 0
    %53 = vmatprep.subr.mxu0 0.0
    %54 = vmatpush1.msra.mxu0 %v42
    %55 = vmatprep.subr.mxu0 0.0
    %56 = vmatpush1.msra.mxu0 %v43
    %57 = vmatprep.subr.mxu0 0.0
    %58 = vmatpush1.msra.mxu0 %v44
    %59 = vmatprep.subr.mxu0 0.0
    %60 = vmatpush1.msra.mxu0 %v45
    %61 = vmatprep.subr.mxu0 0.0
    %62 = vmatpush1.msra.mxu0 0.0
    %63 = vmatprep.subr.mxu0 0.0
    %64 = vmatpush1.msra.mxu0 0.0
    %65 = vmatprep.subr.mxu0 0.0
    %66 = vmatpush1.msra.mxu0 0.0
    %67 = vmatprep.subr.mxu0 0.0
    %68 = vmatpush1.msra.mxu0 0.0
    %69 = vmatprep.subr.mxu0 0.0
    %70 = vmatpush1.msra.mxu0 0.0
    %71 = vmatprep.subr.mxu0 0.0
    %72 = vmatpush1.msra.mxu0 0.0
    %73 = vmatprep.subr.mxu0 0.0
    %74 = vmatpush1.msra.mxu0 0.0
    %75 = vmatprep.subr.mxu0 0.0
    %76 = vmatpush1.msra.mxu0 0.0
    %77 = vmatprep.subr.mxu0 0.0
    %78 = vmatpush1.msra.mxu0 0.0
    %79 = vmatprep.subr.mxu0 0.0
    %80 = vmatpush1.msra.mxu0 0.0
    %81 = vmatprep.subr.mxu0 0.0
    %82 = vmatpush1.msra.mxu0 0.0
    %83 = vmatprep.subr.mxu0 0.0
    %84 = vmatpush1.msra.mxu0 0.0
    %85 = vmatprep.subr.mxu0 0.0
    %86 = vmatpush1.msra.mxu0 0.0
    %87 = vmatprep.subr.mxu0 0.0
    %88 = vmatpush1.msra.mxu0 0.0
    %89 = vmatprep.subr.mxu0 0.0
    %90 = vmatpush1.msra.mxu0 0.0
    %91 = vmatprep.subr.mxu0 0.0
    %92 = vmatpush1.msra.mxu0 0.0
    %93 = vmatprep.subr.mxu0 0.0
    %94 = vmatpush1.msra.mxu0 0.0
    %95 = vmatprep.subr.mxu0 0.0
    %96 = vmatpush1.msra.mxu0 0.0
    %97 = vmatprep.subr.mxu0 0.0
    %98 = vmatpush1.msra.mxu0 0.0
    %99 = vmatprep.subr.mxu0 0.0
    %100 = vmatpush1.msra.mxu0 0.0
    %101 = vmatprep.subr.mxu0 0.0
    %102 = vmatpush1.msra.mxu0 0.0
    %103 = vmatprep.subr.mxu0 0.0
    %104 = vmatpush1.msra.mxu0 0.0
    %105 = vmatprep.subr.mxu0 0.0
    %106 = vmatpush1.msra.mxu0 0.0
    %107 = vmatprep.subr.mxu0 0.0
    %108 = vmatpush1.msra.mxu0 0.0
    %109 = vmatprep.subr.mxu0 0.0
    %110 = vmatpush1.msra.mxu0 0.0
    %111 = vmatprep.subr.mxu0 0.0
    %112 = vmatpush1.msra.mxu0 0.0
    %113 = vmatprep.subr.mxu0 0.0
    %114 = vmatpush1.msra.mxu0 0.0
    %115 = vmatprep.subr.mxu0 0.0
    %116 = vmatpush1.msra.mxu0 0.0
    %117 = vmatprep.mubr.f32.mxu0 0.0
    %118 = vmatmul.mubr.f32.gmra.mrb[0].mxu0 %v48
    %v119 = vpop.f32.mrb[0].mxu0
    %v120 = vadd.f32 0.0, %v119
    %v121 = vpop.f32.mrb[0].mxu0
    %122 = vmatprep.mubr.f32.mxu0 0.0
    %123 = vmatmul.mubr.f32.gmra.mrb[0].mxu0 %v51
    %v124 = vpop.f32.mrb[0].mxu0
    %v125 = vadd.f32 0.0, %v124
    %v126 = vpop.f32.mrb[0].mxu0
    %127 = vdwg.mxu0
    %v128 = vmul.f32 %v120, %v120
    %v129 = vmul.f32 %v125, %v125
    %v130 = vsel %vm46, %v128, 0.0
    %131 = vadd.xlane.f32.xlu0 %v130
    %v132 = vpop.xlane.xlu0 %131
    %v133 = vsel %vm46, %v129, 0.0
    %134 = vadd.xlane.f32.xlu0 %v133
    %v135 = vpop.xlane.xlu0 %134
    %v136 = vadd.f32 %v132, 1e-20
    %v137 = vadd.f32 %v135, 1e-20
    %v138 = vrsqrt.pop %v136
    %v139 = vrsqrt.pop %v137
    %v140 = vmul.f32 %v120, %v138
    %v141 = vmul.f32 %v125, %v139
    %142 = vst.msk [vmem:[#allocation7] sm:$0xff] %vm46, %v140
    %143 = vst.msk [vmem:[#allocation7 + $0x8] sm:$0xff] %vm46, %v141
    // Predicated region
    $region18: #{tpu_custom_call.1} parent=1 // pred_check
      _
    $region19: #{tpu_custom_call.1} parent=1 // pred_check_branch
      %145 = sbr.rel (0) target = $region21
    $region20: #{tpu_custom_call.1} parent=1 // pred_region
      %s147 = ssub.s32 256, 256
      %148 = vsyncadd [#allocation4], %s147
      %s149 = sshll.u32 [#allocation7], 4
      %s150 = int_to_ptr.vmem [resolvable:$true] %s149
      %155 = dma.vmem_to_hbm [thread:$0]  %s150, 256, %s2, [#allocation4], 128, 128, 8
    $region21: #{tpu_custom_call.1} parent=1 // pred_fallthru
      _
    // Predicated region
    $region22: #{tpu_custom_call.1} parent=1 // pred_check
      _
    $region23: #{tpu_custom_call.1} parent=1 // pred_check_branch
      %157 = sbr.rel (0) target = $region25
    $region24: #{tpu_custom_call.1} parent=1 // pred_region
      %158 = dma.done [#allocation4], 256
    $region25: #{tpu_custom_call.1} parent=1 // pred_fallthru
      _
    %159 = vsyncpa [#allocation3], 1
    %160 = vsyncpa [#allocation6], 1
    %161 = vsyncpa [#allocation4], 1

</llo_original>
